<compile_context>
chip_gen: v5e
topology: v5e:2x2
jax: 0.10.0
libtpu: 0.0.40
codegen_flags: <defaults>
</compile_context>

<pallas_src>
import functools

import jax
import jax.numpy as jnp
from jax import lax
from jax.experimental import pallas as pl
from jax.experimental.pallas import tpu as pltpu

_LANE = 128


def _chip_profile():
    """Return (max_block_rows, n_cores, vmem_limit_bytes) per TPU generation."""
    kind = ""
    try:
        kind = (jax.devices()[0].device_kind or "").lower()
    except Exception:  # pragma: no cover - defensive
        pass
    if "v7" in kind or "7x" in kind:
        # 2 TCs/chip, 64 MiB VMEM/TC, ~3.2 TB/s: 2 MiB f32 input blocks
        # (3 inputs x 2 buffers = 12 MiB) + elementwise temps stay well clear
        # of the limit; the 2-way split shards the stream across both TCs.
        return 4096, 2, 48 << 20
    if "v6" in kind:
        # 1 TC, 128 MiB physical VMEM, ~1.4 TB/s: 2 MiB input blocks.
        return 4096, 1, 64 << 20
    if "v4" in kind or "v5p" in kind:
        # Megacore chips (2 TCs), plenty of VMEM.
        return 4096, 2, 64 << 20
    # v5e / unknown: HBM-bound at ~0.8 TB/s and a 16 MiB scoped default; keep
    # 1 MiB blocks (6 MiB double-buffered footprint) with a modest explicit cap.
    return 2048, 1, 32 << 20


def _fused_sq_sum_kernel(*refs, n_preds, block_rows, total_blocks, core_shift,
                         last_valid_rows, has_overlap):
    """Accumulate sum((pred_k - t)^2) for each prediction k into o_ref[0, k]."""
    pred_refs = refs[:n_preds]
    t_ref = refs[n_preds]
    o_ref = refs[n_preds + 1]
    acc_refs = refs[n_preds + 2:]

    c = pl.program_id(0)                 # stream half (parallel / megacore axis)
    i = pl.program_id(1)                 # block within the half (reduction axis)
    phys_block = c * core_shift + i      # must match the input index_map

    fold = (block_rows % 8) == 0                    # static
    has_partial = last_valid_rows != block_rows     # static

    @pl.when(i == 0)
    def _init():
        for a_ref in acc_refs:
            a_ref[...] = jnp.zeros_like(a_ref)

    def accumulate(masked):
        t = t_ref[...].astype(jnp.float32)
        if masked:
            # Block-local row mask against a STATIC valid-row count (only the
            # partial last physical block ever takes this path).
            row = lax.broadcasted_iota(jnp.int32, (block_rows, _LANE), 0)
            row_mask = row < last_valid_rows
        for p_ref, a_ref in zip(pred_refs, acc_refs):
            d = p_ref[...].astype(jnp.float32) - t
            if masked:
                d = jnp.where(row_mask, d, jnp.float32(0.0))
            sq = d * d
            if fold:
                # Fold sublane groups onto one vreg: pure VPU adds, so the
                # persistent accumulator is a single (8, 128) tile per pred.
                sq = sq.reshape(block_rows // 8, 8, _LANE).sum(axis=0)
            a_ref[...] += sq

    # With the 2-way split and an odd block count, the half-boundary block is
    # read by both halves; only half 1 owns it (scalar predicate, no vector
    # masking on interior steps).
    owned = ((c == 1) | (phys_block < core_shift)) if has_overlap else None
    is_last = phys_block == (total_blocks - 1)

    if has_partial:
        full_pred = jnp.logical_not(is_last)
        mask_pred = is_last
        if owned is not None:
            full_pred = owned & full_pred
            mask_pred = owned & mask_pred

        @pl.when(full_pred)
        def _full():
            accumulate(masked=False)

        @pl.when(mask_pred)
        def _partial():
            accumulate(masked=True)
    else:
        if owned is None:
            accumulate(masked=False)
        else:
            @pl.when(owned)
            def _owned():
                accumulate(masked=False)

    @pl.when(i == pl.num_programs(1) - 1)
    def _finalize():
        for k, a_ref in enumerate(acc_refs):
            o_ref[0, k] = jnp.sum(a_ref[...])   # one small cross-lane reduce


def _fused_mse_means(preds, tgt, *, max_block_rows=None, n_cores=None):
    """mean((pred_k - tgt)**2) for every pred_k, via one fused Pallas pass."""
    n = int(tgt.size)
    for p in preds:
        if int(p.size) != n:
            raise ValueError("prediction/target element counts must match")
    n_preds = len(preds)

    prof_rows, prof_cores, vmem_limit = _chip_profile()
    if max_block_rows is None:
        max_block_rows = prof_rows
    if n_cores is None:
        n_cores = prof_cores
    n_cores = 2 if n_cores >= 2 else 1

    # Flatten (free bitcast reshapes for contiguous inputs).
    pred_flats = [p.reshape(-1) for p in preds]
    tgt_flat = tgt.reshape(-1)

    n_main = (n // _LANE) * _LANE     # lane-aligned prefix handled in-kernel
    sums = None

    if n_main > 0:
        rows = n_main // _LANE
        block_rows = rows if rows <= max_block_rows else max_block_rows
        total_blocks = pl.cdiv(rows, block_rows)
        if total_blocks < 2:
            n_cores = 1               # no point splitting a single block
        blocks_per_core = pl.cdiv(total_blocks, n_cores)
        core_shift = total_blocks - blocks_per_core
        last_valid_rows = rows - (total_blocks - 1) * block_rows
        has_overlap = (n_cores == 2) and (core_shift < blocks_per_core)

        if n_main == n:
            mats = [a.reshape(rows, _LANE) for a in pred_flats + [tgt_flat]]
        else:
            # TODO(synk): this lane-aligned prefix slice still costs one XLA
            # copy per ragged operand; only the <=127-element tail escapes it.
            mats = [a[:n_main].reshape(rows, _LANE)
                    for a in pred_flats + [tgt_flat]]

        acc_rows = 8 if (block_rows % 8) == 0 else block_rows

        kernel = functools.partial(
            _fused_sq_sum_kernel, n_preds=n_preds, block_rows=block_rows,
            total_blocks=total_blocks, core_shift=core_shift,
            last_valid_rows=last_valid_rows, has_overlap=has_overlap)

        in_spec = pl.BlockSpec((block_rows, _LANE),
                               lambda c, i: (c * core_shift + i, 0))

        bytes_in = sum(int(m.size) * m.dtype.itemsize for m in mats)
        cost = pl.CostEstimate(flops=3 * n_preds * n_main, transcendentals=0,
                               bytes_accessed=bytes_in + n_cores * n_preds * 4)

        partial_sums = pl.pallas_call(
            kernel,
            out_shape=jax.ShapeDtypeStruct((n_cores, n_preds), jnp.float32),
            grid=(n_cores, blocks_per_core),
            in_specs=[in_spec] * (n_preds + 1),
            out_specs=pl.BlockSpec((1, n_preds), lambda c, i: (c, 0),
                                   memory_space=pltpu.MemorySpace.SMEM),
            scratch_shapes=[pltpu.VMEM((acc_rows, _LANE), jnp.float32)
                            for _ in range(n_preds)],
            compiler_params=pltpu.CompilerParams(
                dimension_semantics=("parallel", "arbitrary"),
                vmem_limit_bytes=vmem_limit),
            cost_estimate=cost,
        )(*mats)
        sums = jnp.sum(partial_sums, axis=0)          # combine the two halves

    if n_main < n:
        # <=127-element ragged tail handled in plain JAX instead of padding
        # (a jnp.pad would re-read + re-write every ragged operand in HBM).
        t_tail = tgt_flat[n_main:].astype(jnp.float32)
        tail = jnp.stack([
            jnp.sum((pf[n_main:].astype(jnp.float32) - t_tail) ** 2)
            for pf in pred_flats])
        sums = tail if sums is None else sums + tail

    return sums / jnp.float32(n)


def ct_mse_loss(inputs, targets, *, max_block_rows=None, n_cores=None):
    """JAX/Pallas equivalent of CT_MSELoss.forward(inputs, targets)."""
    if targets.shape[1] > 1:
        # TODO(synk): this channel-0 slice is an n-read + n-write XLA copy in
        # front of the kernel; fusing it would need per-image BlockSpecs that
        # don't compose with the flat lane-dense stream used here.
        targets = targets[:, 0]
    # TODO(synk): if targets keeps a singleton channel dim, PyTorch's MSELoss
    # would broadcast (with a warning); here matching element counts are used.
    preds = [inputs["transmittance_coarse"]]
    if "transmittance_fine" in inputs:
        preds.append(inputs["transmittance_fine"])
    means = _fused_mse_means(preds, targets,
                             max_block_rows=max_block_rows, n_cores=n_cores)
    return jnp.sum(means)


def _ct_mse_loss_ref(inputs, targets):
    """Pure-JAX reference for correctness checking."""
    if targets.shape[1] > 1:
        targets = targets[:, 0]
    t = targets.astype(jnp.float32)
    loss = jnp.mean((inputs["transmittance_coarse"].astype(jnp.float32) - t) ** 2)
    if "transmittance_fine" in inputs:
        loss = loss + jnp.mean(
            (inputs["transmittance_fine"].astype(jnp.float32) - t) ** 2)
    return loss


if __name__ == "__main__":
    key = jax.random.PRNGKey(0)
    k_c, k_f, k_t, k_c2, k_t2, k_c3, k_f3, k_t3 = jax.random.split(key, 8)

    # --- test 1: coarse + fine, NCHW targets with C > 1, lane-aligned size ---
    B, C, H, W = 2, 4, 16, 16
    targets = jax.random.uniform(k_t, (B, C, H, W), dtype=jnp.float32)
    coarse = jax.random.uniform(k_c, (B, H, W), dtype=jnp.float32)
    fine = jax.random.uniform(k_f, (B, H, W), dtype=jnp.float32)
    inputs = {"transmittance_coarse": coarse, "transmittance_fine": fine}
    loss = jax.block_until_ready(ct_mse_loss(inputs, targets))
    ref = _ct_mse_loss_ref(inputs, targets)
    assert jnp.allclose(loss, ref, rtol=1e-5, atol=1e-6), (loss, ref)

    # --- test 2: coarse only, bf16 preds, ragged size (plain-JAX tail path) --
    B2, C2, H2, W2 = 3, 2, 9, 17              # n = 459 -> 3 lane rows + 75 tail
    targets2 = jax.random.uniform(k_t2, (B2, C2, H2, W2), dtype=jnp.float32)
    coarse2 = jax.random.uniform(k_c2, (B2, H2, W2)).astype(jnp.bfloat16)
    inputs2 = {"transmittance_coarse": coarse2}
    loss2 = jax.block_until_ready(ct_mse_loss(inputs2, targets2))
    ref2 = _ct_mse_loss_ref(inputs2, targets2)
    assert jnp.allclose(loss2, ref2, rtol=1e-5, atol=1e-6), (loss2, ref2)

    # --- test 3: multi-block + forced 2-way split + partial last block -------
    B3, C3, H3, W3 = 2, 2, 32, 36              # n = 2304 -> 18 rows of 128
    targets3 = jax.random.uniform(k_t3, (B3, C3, H3, W3), dtype=jnp.float32)
    coarse3 = jax.random.uniform(k_c3, (B3, H3, W3), dtype=jnp.float32)
    fine3 = jax.random.uniform(k_f3, (B3, H3, W3), dtype=jnp.float32)
    inputs3 = {"transmittance_coarse": coarse3, "transmittance_fine": fine3}
    loss3 = jax.block_until_ready(
        ct_mse_loss(inputs3, targets3, max_block_rows=8, n_cores=2))
    ref3 = _ct_mse_loss_ref(inputs3, targets3)
    assert jnp.allclose(loss3, ref3, rtol=1e-5, atol=1e-6), (loss3, ref3)

    print("KERNEL_OK")
</pallas_src>

<mosaic_0001>
module attributes {stable_mosaic.version = 11 : i64} {
  func.func @_fused_sq_sum_kernel(%arg0: i32, %arg1: i32, %arg2: memref<4x128xf32, #tpu.memory_space<vmem>>, %arg3: memref<4x128xf32, #tpu.memory_space<vmem>>, %arg4: memref<4x128xf32, #tpu.memory_space<vmem>>, %arg5: memref<1x2xf32, #tpu.memory_space<smem>>, %arg6: memref<4x128xf32, #tpu.memory_space<vmem>>, %arg7: memref<4x128xf32, #tpu.memory_space<vmem>>) attributes {dimension_semantics = [#tpu.dimension_semantics<parallel>, #tpu.dimension_semantics<arbitrary>], iteration_bounds = array<i64: 1, 1>, scalar_prefetch = 0 : i64, scratch_operands = 2 : i64, tpu.core_type = #tpu.core_type<tc>, window_params = [{transform_indices = @transform_0, window_bounds = array<i64: 4, 128>}, {transform_indices = @transform_1, window_bounds = array<i64: 4, 128>}, {transform_indices = @transform_2, window_bounds = array<i64: 4, 128>}, {transform_indices = @transform_3, window_bounds = array<i64: 1, 2>}]} {
    %c0_i32 = arith.constant 0 : i32
    %0 = arith.cmpi eq, %arg1, %c0_i32 : i32
    %1 = arith.extui %0 : i1 to i32
    %c0_i32_0 = arith.constant 0 : i32
    %2 = arith.cmpi ne, %1, %c0_i32_0 : i32
    scf.if %2 {
      %cst = arith.constant 0.000000e+00 : f32
      %19 = vector.broadcast %cst : f32 to vector<4x128xf32>
      %c0_16 = arith.constant 0 : index
      %c0_17 = arith.constant 0 : index
      %20 = vector.load %arg6[%c0_16, %c0_17] : memref<4x128xf32, #tpu.memory_space<vmem>>, vector<4x128xf32>
      tpu.vector_store %arg6[%c0_16, %c0_17], %19 {strides = array<i32>} : memref<4x128xf32, #tpu.memory_space<vmem>>, vector<4x128xf32>,
      %cst_18 = arith.constant 0.000000e+00 : f32
      %21 = vector.broadcast %cst_18 : f32 to vector<4x128xf32>
      %c0_19 = arith.constant 0 : index
      %c0_20 = arith.constant 0 : index
      %22 = vector.load %arg7[%c0_19, %c0_20] : memref<4x128xf32, #tpu.memory_space<vmem>>, vector<4x128xf32>
      tpu.vector_store %arg7[%c0_19, %c0_20], %21 {strides = array<i32>} : memref<4x128xf32, #tpu.memory_space<vmem>>, vector<4x128xf32>,
    } else {
    }
    %c0 = arith.constant 0 : index
    %c0_1 = arith.constant 0 : index
    %3 = vector.load %arg4[%c0, %c0_1] : memref<4x128xf32, #tpu.memory_space<vmem>>, vector<4x128xf32>
    %c0_2 = arith.constant 0 : index
    %c0_3 = arith.constant 0 : index
    %4 = vector.load %arg2[%c0_2, %c0_3] : memref<4x128xf32, #tpu.memory_space<vmem>>, vector<4x128xf32>
    %5 = arith.subf %4, %3 : vector<4x128xf32>
    %6 = arith.mulf %5, %5 : vector<4x128xf32>
    %c0_4 = arith.constant 0 : index
    %c0_5 = arith.constant 0 : index
    %7 = vector.load %arg6[%c0_4, %c0_5] : memref<4x128xf32, #tpu.memory_space<vmem>>, vector<4x128xf32>
    %8 = arith.addf %7, %6 : vector<4x128xf32>
    %c0_6 = arith.constant 0 : index
    %c0_7 = arith.constant 0 : index
    %9 = vector.load %arg6[%c0_6, %c0_7] : memref<4x128xf32, #tpu.memory_space<vmem>>, vector<4x128xf32>
    tpu.vector_store %arg6[%c0_6, %c0_7], %8 {strides = array<i32>} : memref<4x128xf32, #tpu.memory_space<vmem>>, vector<4x128xf32>,
    %c0_8 = arith.constant 0 : index
    %c0_9 = arith.constant 0 : index
    %10 = vector.load %arg3[%c0_8, %c0_9] : memref<4x128xf32, #tpu.memory_space<vmem>>, vector<4x128xf32>
    %11 = arith.subf %10, %3 : vector<4x128xf32>
    %12 = arith.mulf %11, %11 : vector<4x128xf32>
    %c0_10 = arith.constant 0 : index
    %c0_11 = arith.constant 0 : index
    %13 = vector.load %arg7[%c0_10, %c0_11] : memref<4x128xf32, #tpu.memory_space<vmem>>, vector<4x128xf32>
    %14 = arith.addf %13, %12 : vector<4x128xf32>
    %c0_12 = arith.constant 0 : index
    %c0_13 = arith.constant 0 : index
    %15 = vector.load %arg7[%c0_12, %c0_13] : memref<4x128xf32, #tpu.memory_space<vmem>>, vector<4x128xf32>
    tpu.vector_store %arg7[%c0_12, %c0_13], %14 {strides = array<i32>} : memref<4x128xf32, #tpu.memory_space<vmem>>, vector<4x128xf32>,
    %c0_i32_14 = arith.constant 0 : i32
    %16 = arith.cmpi eq, %arg1, %c0_i32_14 : i32
    %17 = arith.extui %16 : i1 to i32
    %c0_i32_15 = arith.constant 0 : i32
    %18 = arith.cmpi ne, %17, %c0_i32_15 : i32
    scf.if %18 {
      %c0_16 = arith.constant 0 : index
      %c0_17 = arith.constant 0 : index
      %19 = vector.load %arg6[%c0_16, %c0_17] : memref<4x128xf32, #tpu.memory_space<vmem>>, vector<4x128xf32>
      %20 = vector.shape_cast %19 : vector<4x128xf32> to vector<1x4x128xf32>
      %cst = arith.constant dense<0.000000e+00> : vector<1xf32>
      %21 = vector.multi_reduction <add>, %20, %cst [1, 2] : vector<1x4x128xf32> to vector<1xf32>
      %22 = vector.shape_cast %21 : vector<1xf32> to vector<1x1x1xf32>
      %23 = vector.extract %22[0, 0, 0] : f32 from vector<1x1x1xf32>
      %c0_18 = arith.constant 0 : index
      %c0_19 = arith.constant 0 : index
      %24 = memref.load %arg5[%c0_18, %c0_19] : memref<1x2xf32, #tpu.memory_space<smem>>
      memref.store %23, %arg5[%c0_18, %c0_19] : memref<1x2xf32, #tpu.memory_space<smem>>
      %c0_20 = arith.constant 0 : index
      %c0_21 = arith.constant 0 : index
      %25 = vector.load %arg7[%c0_20, %c0_21] : memref<4x128xf32, #tpu.memory_space<vmem>>, vector<4x128xf32>
      %26 = vector.shape_cast %25 : vector<4x128xf32> to vector<1x4x128xf32>
      %cst_22 = arith.constant dense<0.000000e+00> : vector<1xf32>
      %27 = vector.multi_reduction <add>, %26, %cst_22 [1, 2] : vector<1x4x128xf32> to vector<1xf32>
      %28 = vector.shape_cast %27 : vector<1xf32> to vector<1x1x1xf32>
      %29 = vector.extract %28[0, 0, 0] : f32 from vector<1x1x1xf32>
      %c0_23 = arith.constant 0 : index
      %c1 = arith.constant 1 : index
      %30 = memref.load %arg5[%c0_23, %c1] : memref<1x2xf32, #tpu.memory_space<smem>>
      memref.store %29, %arg5[%c0_23, %c1] : memref<1x2xf32, #tpu.memory_space<smem>>
    } else {
    }
    return
  }
  func.func @transform_0(%arg0: i32, %arg1: i32) -> (i32, i32) {
    %c0_i32 = arith.constant 0 : i32
    %0 = arith.muli %arg0, %c0_i32 : i32
    %1 = arith.addi %0, %arg1 : i32
    %c0_i32_0 = arith.constant 0 : i32
    %c0_i32_1 = arith.constant 0 : i32
    return %1, %c0_i32_0 : i32, i32
  }
  func.func @transform_1(%arg0: i32, %arg1: i32) -> (i32, i32) {
    %c0_i32 = arith.constant 0 : i32
    %0 = arith.muli %arg0, %c0_i32 : i32
    %1 = arith.addi %0, %arg1 : i32
    %c0_i32_0 = arith.constant 0 : i32
    %c0_i32_1 = arith.constant 0 : i32
    return %1, %c0_i32_0 : i32, i32
  }
  func.func @transform_2(%arg0: i32, %arg1: i32) -> (i32, i32) {
    %c0_i32 = arith.constant 0 : i32
    %0 = arith.muli %arg0, %c0_i32 : i32
    %1 = arith.addi %0, %arg1 : i32
    %c0_i32_0 = arith.constant 0 : i32
    %c0_i32_1 = arith.constant 0 : i32
    return %1, %c0_i32_0 : i32, i32
  }
  func.func @transform_3(%arg0: i32, %arg1: i32) -> (i32, i32) {
    %c0_i32 = arith.constant 0 : i32
    %c0_i32_0 = arith.constant 0 : i32
    return %arg0, %c0_i32 : i32, i32
  }
}

</mosaic_0001>

<llo_original>
// kernel: tpu_custom_call.1
$region0: #{tpu_custom_call.1}
  #allocation0 [shape = 'u32[]', space=smem, size = 0x4, offset = 0x4, fixed_abs, tag = 'smem constant byte address 0x4 - core index']
  #allocation1 [shape = 'u32[72,128]{1,0:T(1,128)}', space=vmem, size = 0x9000, scoped, tag = 'internal scratch']
  #allocation2 [shape = 'f32[4,128]{1,0:T(4,128)}', space=vmem, size = 0x800, scoped, tag = 'scratch operand']
  #allocation3 [shape = 'f32[4,128]{1,0:T(4,128)}', space=vmem, size = 0x800, scoped, tag = 'scratch operand']
  %s0 = inlined_call_operand.hbm [shape: f32[4,128], index: 0, kind: input, shape index: {}]
  %s1 = inlined_call_operand.hbm [shape: f32[4,128], index: 1, kind: input, shape index: {}]
  %s2 = inlined_call_operand.hbm [shape: f32[4,128], index: 2, kind: input, shape index: {}]
  %s3 = inlined_call_operand.hbm [shape: f32[1,2], index: 3, kind: output, shape index: {}]
  %s4 = sld [smem:[#allocation0]]
  $region42: #{tpu_custom_call.1} parent=0
    _
  %s6 = ssub.s32 1, %s4
  %s7 = scalar_select 0, %s6, %s4
  $region1: #{tpu_custom_call.1} parent=0
    #allocation4 [shape = 'u8[2048]{0}', space=vmem, size = 0x800, scoped, tag = 'input window, operand 0, single buffered']
    #allocation5 [shape = 's32[1]{0}', space=sflag, size = 0x4, scoped, tag = 'scoped memory for tpu_custom_call.1']
    #allocation6 [shape = 's32[1]{0}', space=sflag, size = 0x4, scoped, tag = 'scoped memory for tpu_custom_call.1']
    #allocation7 [shape = 'u8[2048]{0}', space=vmem, size = 0x800, scoped, tag = 'input window, operand 1, single buffered']
    #allocation8 [shape = 's32[1]{0}', space=sflag, size = 0x4, scoped, tag = 'scoped memory for tpu_custom_call.1']
    #allocation9 [shape = 'u8[2048]{0}', space=vmem, size = 0x800, scoped, tag = 'input window, operand 2, single buffered']
    #allocation10 [shape = 'u8[512]{0}', space=smem, size = 0x200, scoped, tag = 'output window, operand 0, single buffered']
    %8 = vsyncpa [#allocation5], 0
    %9 = vsyncpa [#allocation8], 0
    %10 = vsyncpa [#allocation6], 0
    // Predicated region
    $region2: #{tpu_custom_call.1} parent=1 // pred_check
      _
    $region3: #{tpu_custom_call.1} parent=1 // pred_check_branch
      %12 = sbr.rel (0) target = $region5
    $region4: #{tpu_custom_call.1} parent=1 // pred_region
      %14 = vsyncadd [#allocation5], 0
      %s16 = sshll.u32 %s0, 4
      %s17 = int_to_ptr.hbm [resolvable:$true] %s16
      %s18 = sshll.u32 [#allocation4], 4
      %s19 = int_to_ptr.vmem [resolvable:$true] %s18
      %21 = dma.hbm_to_vmem [thread:$0]  %s17, 64, %s19, [#allocation5]
    $region5: #{tpu_custom_call.1} parent=1 // pred_fallthru
      _
    // Predicated region
    $region6: #{tpu_custom_call.1} parent=1 // pred_check
      _
    $region7: #{tpu_custom_call.1} parent=1 // pred_check_branch
      %23 = sbr.rel (0) target = $region9
    $region8: #{tpu_custom_call.1} parent=1 // pred_region
      %25 = vsyncadd [#allocation8], 0
      %s27 = sshll.u32 %s1, 4
      %s28 = int_to_ptr.hbm [resolvable:$true] %s27
      %s29 = sshll.u32 [#allocation7], 4
      %s30 = int_to_ptr.vmem [resolvable:$true] %s29
      %32 = dma.hbm_to_vmem [thread:$0]  %s28, 64, %s30, [#allocation8]
    $region9: #{tpu_custom_call.1} parent=1 // pred_fallthru
      _
    // Predicated region
    $region10: #{tpu_custom_call.1} parent=1 // pred_check
      _
    $region11: #{tpu_custom_call.1} parent=1 // pred_check_branch
      %34 = sbr.rel (0) target = $region13
    $region12: #{tpu_custom_call.1} parent=1 // pred_region
      %36 = vsyncadd [#allocation8], 0
      %s38 = sshll.u32 %s2, 4
      %s39 = int_to_ptr.hbm [resolvable:$true] %s38
      %s40 = sshll.u32 [#allocation9], 4
      %s41 = int_to_ptr.vmem [resolvable:$true] %s40
      %43 = dma.hbm_to_vmem [thread:$0]  %s39, 64, %s41, [#allocation8]
    $region13: #{tpu_custom_call.1} parent=1 // pred_fallthru
      _
    // Predicated region
    $region14: #{tpu_custom_call.1} parent=1 // pred_check
      _
    $region15: #{tpu_custom_call.1} parent=1 // pred_check_branch
      %45 = sbr.rel (0) target = $region17
    $region16: #{tpu_custom_call.1} parent=1 // pred_region
      %47 = dma.done [#allocation5], 64
    $region17: #{tpu_custom_call.1} parent=1 // pred_fallthru
      _
    // Predicated region
    $region18: #{tpu_custom_call.1} parent=1 // pred_check
      _
    $region19: #{tpu_custom_call.1} parent=1 // pred_check_branch
      %49 = sbr.rel (0) target = $region21
    $region20: #{tpu_custom_call.1} parent=1 // pred_region
      %51 = dma.done [#allocation8], 64
    $region21: #{tpu_custom_call.1} parent=1 // pred_fallthru
      _
    // Predicated region
    $region22: #{tpu_custom_call.1} parent=1 // pred_check
      _
    $region23: #{tpu_custom_call.1} parent=1 // pred_check_branch
      %53 = sbr.rel (0) target = $region25
    $region24: #{tpu_custom_call.1} parent=1 // pred_region
      %55 = dma.done [#allocation8], 64
    $region25: #{tpu_custom_call.1} parent=1 // pred_fallthru
      _
    %p56 = scmp.eq.s32.totalorder 0, 0
    // Predicated region
    $region26: #{tpu_custom_call.1} parent=1 // pred_check
      %p57 = pneg %p56
    $region27: #{tpu_custom_call.1} parent=1 // pred_check_branch
      %59 = sbr.rel (%p57) target = $region29
    $region28: #{tpu_custom_call.1} parent=1 // pred_region
      %60 = vst [vmem:[#allocation2] sm:$0xf] 0.0
      %61 = vst [vmem:[#allocation3] sm:$0xf] 0.0
    $region29: #{tpu_custom_call.1} parent=1 // pred_fallthru
      _
    %v62 = vld [vmem:[#allocation9] sm:$0xf]
    %v63 = vld [vmem:[#allocation4] sm:$0xf]
    %v64 = vsub.f32 %v63, %v62
    %v65 = vmul.f32 %v64, %v64
    %v66 = vld [vmem:[#allocation2] sm:$0xf]
    %v67 = vadd.f32 %v66, %v65
    %68 = vst [vmem:[#allocation2] sm:$0xf] %v67
    %v69 = vld [vmem:[#allocation7] sm:$0xf]
    %v70 = vsub.f32 %v69, %v62
    %v71 = vmul.f32 %v70, %v70
    %v72 = vld [vmem:[#allocation3] sm:$0xf]
    %v73 = vadd.f32 %v72, %v71
    %74 = vst [vmem:[#allocation3] sm:$0xf] %v73
    // Predicated region
    $region30: #{tpu_custom_call.1} parent=1 // pred_check
      %p75 = pneg %p56
    $region31: #{tpu_custom_call.1} parent=1 // pred_check_branch
      %77 = sbr.rel (%p75) target = $region33
    $region32: #{tpu_custom_call.1} parent=1 // pred_region
      %v78 = vld [vmem:[#allocation2] sm:$0xf]
      %vm79 = vcmask 1043456
      %v80 = vsel %vm79, %v78, 0.0
      %81 = vadd.xlane.f32.xlu0 %v80
      %v82 = vpop.xlane.xlu0 %81
      %v83 = vrot.slane %v82, 4
      %v84 = vadd.f32 %v82, %v83
      %v85 = vrot.slane %v84, 2
      %v86 = vadd.f32 %v84, %v85
      %v87 = vrot.slane %v86, 1
      %v88 = vadd.f32 %v86, %v87
      %s89 = vtos %v88
      %s90 = scalar_lea.smem [#allocation10], 0
      %91 = sst [smem:[%s90]] %s89
      %v92 = vld [vmem:[#allocation3] sm:$0xf]
      %v93 = vsel %vm79, %v92, 0.0
      %94 = vadd.xlane.f32.xlu0 %v93
      %v95 = vpop.xlane.xlu0 %94
      %v96 = vrot.slane %v95, 4
      %v97 = vadd.f32 %v95, %v96
      %v98 = vrot.slane %v97, 2
      %v99 = vadd.f32 %v97, %v98
      %v100 = vrot.slane %v99, 1
      %v101 = vadd.f32 %v99, %v100
      %s102 = vtos %v101
      %s103 = scalar_lea.smem [#allocation10], 1
      %104 = sst [smem:[%s103]] %s102
    $region33: #{tpu_custom_call.1} parent=1 // pred_fallthru
      _
    // Predicated region
    $region34: #{tpu_custom_call.1} parent=1 // pred_check
      _
    $region35: #{tpu_custom_call.1} parent=1 // pred_check_branch
      %106 = sbr.rel (0) target = $region37
    $region36: #{tpu_custom_call.1} parent=1 // pred_region
      %108 = vsyncadd [#allocation6], 0
      %s110 = sshll.u32 %s3, 4
      %s111 = int_to_ptr.hbm [resolvable:$true] %s110
      %113 = dma.smem_to_hbm [#allocation10], 16, %s111, [#allocation6]
    $region37: #{tpu_custom_call.1} parent=1 // pred_fallthru
      _
    // Predicated region
    $region38: #{tpu_custom_call.1} parent=1 // pred_check
      _
    $region39: #{tpu_custom_call.1} parent=1 // pred_check_branch
      %115 = sbr.rel (0) target = $region41
    $region40: #{tpu_custom_call.1} parent=1 // pred_region
      %117 = dma.done [#allocation6], 16
    $region41: #{tpu_custom_call.1} parent=1 // pred_fallthru
      _
    %118 = sfence
    %119 = vsyncpa [#allocation5], 1
    %120 = vsyncpa [#allocation8], 1
    %121 = vsyncpa [#allocation6], 1

</llo_original>
